<compile_context>
chip_gen: v7x
topology: tpu7x:2x2x1
jax: 0.10.0
libtpu: 0.0.40
codegen_flags: <defaults>
</compile_context>

<pallas_src>
import functools

import jax
import jax.numpy as jnp
from jax import lax
from jax.experimental import pallas as pl
from jax.experimental.pallas import tpu as pltpu


# ---------------------------------------------------------------------------
# Kernel
# ---------------------------------------------------------------------------
def ffn_kernel(x_ref, gamma_ref, beta_ref, w1_ref, b1_ref, w2_ref, b2_ref,
               o_ref, *, eps: float, e_chunk: int):
    """LayerNorm -> Linear(D,E)+b -> Swish -> Linear(E,D)+b for one row tile."""
    bm, D = x_ref.shape
    E = w1_ref.shape[1]
    n_chunks = E // e_chunk

    # ---- LayerNorm: fp32 statistics, single pass (E[x], E[x^2]) ----
    x = x_ref[...].astype(jnp.float32)
    inv_d = 1.0 / D
    mean = jnp.sum(x, axis=-1, keepdims=True) * inv_d
    mean_sq = jnp.sum(x * x, axis=-1, keepdims=True) * inv_d
    var = jnp.maximum(mean_sq - mean * mean, 0.0)
    xn = (x - mean) * lax.rsqrt(var + eps)
    xn = xn * gamma_ref[...].astype(jnp.float32) + beta_ref[...].astype(jnp.float32)

    w_dtype = w1_ref.dtype
    xn_w = xn.astype(w_dtype)   # MXU operand in the weights' native dtype

    # TODO(synk): dropout omitted (inference); a training kernel would draw a
    # mask with pltpu.prng_seed + pltpu.prng_random_bits.

    # ---- Chunked Linear(D,E) + bias + Swish + Linear(E,D) accumulation ----
    y = jnp.zeros((bm, w2_ref.shape[1]), jnp.float32)
    for c in range(n_chunks):          # static unroll; n_chunks is small
        lo = c * e_chunk
        h = jnp.dot(xn_w, w1_ref[:, pl.ds(lo, e_chunk)],
                    preferred_element_type=jnp.float32)
        h = h + b1_ref[:, pl.ds(lo, e_chunk)].astype(jnp.float32)
        # Swish / SiLU: exp and reciprocal use the EUP slot.
        s = jnp.exp(-h)
        h = h * pl.reciprocal(1.0 + s, approx=True)
        y = y + jnp.dot(h.astype(w_dtype), w2_ref[pl.ds(lo, e_chunk), :],
                        preferred_element_type=jnp.float32)

    y = y + b2_ref[...].astype(jnp.float32)
    o_ref[...] = y.astype(o_ref.dtype)


# ---------------------------------------------------------------------------
# One-time (cached) capability / hardware queries — kept out of the hot path.
# ---------------------------------------------------------------------------
@functools.lru_cache(maxsize=None)
def _single_buffered_weights_supported() -> bool:
    """Probe pipeline_mode=pl.Buffered(1) once via a tiny lowering-only compile."""
    if not hasattr(pl, "Buffered"):
        return False
    try:
        def k(a_ref, w_ref, o_ref):
            o_ref[...] = a_ref[...] + w_ref[...]

        call = pl.pallas_call(
            k,
            out_shape=jax.ShapeDtypeStruct((16, 128), jnp.float32),
            grid=(2,),
            in_specs=[pl.BlockSpec((8, 128), lambda i: (i, 0)),
                      pl.BlockSpec((8, 128), lambda i: (0, 0),
                                   pipeline_mode=pl.Buffered(1))],
            out_specs=pl.BlockSpec((8, 128), lambda i: (i, 0)),
        )
        jax.jit(call).lower(
            jax.ShapeDtypeStruct((16, 128), jnp.float32),
            jax.ShapeDtypeStruct((8, 128), jnp.float32)).compile()
        return True
    except Exception:
        return False


@functools.lru_cache(maxsize=None)
def _vmem_budget_cap() -> int:
    """Per-core VMEM capacity minus ~12 MiB headroom for Mosaic scratch."""
    try:
        cap = int(pltpu.get_tpu_info().vmem_capacity_bytes)
    except Exception:
        cap = 64 * 2**20          # conservative (v7x per-TC)
    return max(cap - 12 * 2**20, 32 * 2**20)


def _pick_e_chunk(E: int, target: int = 512) -> int:
    """Largest multiple of 128 <= target that divides E (or E itself)."""
    if E % 128 != 0 or E <= target:
        return E
    c = (min(target, E) // 128) * 128
    while c > 128 and E % c != 0:
        c -= 128
    return c if E % c == 0 else E


# ---------------------------------------------------------------------------
# Wrapper
# ---------------------------------------------------------------------------
def feed_forward(x, gamma, beta, w1, b1, w2, b2, *, eps: float = 1e-5,
                 block_m: int = 1024, e_chunk: int = 512):
    """x: (B, S, D) -> (B, S, D). Weights keep their dtype (bf16 recommended)."""
    B, S, D = x.shape
    E = w1.shape[1]
    M = B * S

    e_chunk = _pick_e_chunk(E, e_chunk)
    assert E % e_chunk == 0

    # Row tile: multiple of the input dtype's sublane packing, as large as the
    # VMEM budget allows.  With D=128 the MXU runs half-width passes on
    # v6e/v7x (256x256 arrays), so row throughput is the main lever; on v5e
    # (128x128 MXU) D=128 is a perfect fit already.
    sub = 16 if x.dtype == jnp.bfloat16 else 8
    bm = min(block_m, pl.cdiv(M, sub) * sub)
    bm = max(sub, (bm // sub) * sub)

    single_buf = _single_buffered_weights_supported()
    weight_factor = 1 if single_buf else 2
    weight_bytes = sum(int(a.size) * a.dtype.itemsize
                       for a in (w1, w2, gamma, beta, b1, b2))
    out_dtype = x.dtype

    def footprint(bm_):
        io = 2 * bm_ * D * (x.dtype.itemsize + out_dtype.itemsize)   # 2-deep tiles
        ln = bm_ * D * (4 + 4 + w1.dtype.itemsize)                   # x_f32, xn, cast
        hid = bm_ * e_chunk * (4 + 4 + w1.dtype.itemsize)            # h, swish, cast
        acc = bm_ * D * 4                                            # y accumulator
        return weight_factor * weight_bytes + io + ln + hid + acc

    vmem_cap = _vmem_budget_cap()
    while bm > sub and 2 * footprint(bm) > vmem_cap:
        bm = max(sub, (bm // 2 // sub) * sub)

    vmem_limit = int(min(max(2 * footprint(bm), 32 * 2**20), vmem_cap))

    gamma2 = gamma.reshape(1, D)
    beta2 = beta.reshape(1, D)
    b1_2 = b1.reshape(1, E)
    b2_2 = b2.reshape(1, D)

    def inv_spec(shape):
        # Grid-invariant operand (weights / LN params / biases).
        if single_buf:
            return pl.BlockSpec(shape, lambda i: (0, 0),
                                pipeline_mode=pl.Buffered(1))
        return pl.BlockSpec(shape, lambda i: (0, 0))

    cost = pl.CostEstimate(
        flops=4 * M * D * E,                 # two matmuls
        transcendentals=M * E,               # exp in Swish
        bytes_accessed=int(2 * M * D * x.dtype.itemsize + weight_bytes),
    )

    x2 = x.reshape(M, D)
    out2 = pl.pallas_call(
        functools.partial(ffn_kernel, eps=eps, e_chunk=e_chunk),
        out_shape=jax.ShapeDtypeStruct((M, D), out_dtype),
        grid_spec=pltpu.PrefetchScalarGridSpec(
            num_scalar_prefetch=0,
            grid=(pl.cdiv(M, bm),),          # ragged last tile handled by Pallas
            in_specs=[
                pl.BlockSpec((bm, D), lambda i: (i, 0)),   # x rows (pipelined)
                inv_spec((1, D)),                          # gamma
                inv_spec((1, D)),                          # beta
                inv_spec((D, E)),                          # w1
                inv_spec((1, E)),                          # b1
                inv_spec((E, D)),                          # w2
                inv_spec((1, D)),                          # b2
            ],
            out_specs=pl.BlockSpec((bm, D), lambda i: (i, 0)),
        ),
        compiler_params=pltpu.CompilerParams(
            dimension_semantics=("parallel",),             # megacore sharding on v7x
            vmem_limit_bytes=vmem_limit),
        cost_estimate=cost,
    )(x2, gamma2, beta2, w1, b1_2, w2, b2_2)

    return out2.reshape(B, S, D)


# ---------------------------------------------------------------------------
# Pure-JAX reference
# ---------------------------------------------------------------------------
def reference(x, gamma, beta, w1, b1, w2, b2, eps=1e-5):
    xf = x.astype(jnp.float32)
    mean = jnp.mean(xf, axis=-1, keepdims=True)
    var = jnp.mean(jnp.square(xf - mean), axis=-1, keepdims=True)
    xn = (xf - mean) * lax.rsqrt(var + eps)
    xn = xn * gamma.astype(jnp.float32) + beta.astype(jnp.float32)
    h = xn @ w1.astype(jnp.float32) + b1.astype(jnp.float32)
    h = h * jax.nn.sigmoid(h)
    return h @ w2.astype(jnp.float32) + b2.astype(jnp.float32)


if __name__ == "__main__":
    # Small shapes consistent with the module: (batch, seq, encoder_dim).
    # D=128 keeps the output tile lane-dense (no masked stores).
    batch, seq, encoder_dim, expansion_factor = 2, 8, 128, 4
    expand_dim = encoder_dim * expansion_factor
    dtype = jnp.bfloat16  # bf16 operands are MXU-native on v6e/v7x

    key = jax.random.PRNGKey(0)
    kx, kg, kb, kw1, kb1, kw2, kb2 = jax.random.split(key, 7)

    x = jax.random.normal(kx, (batch, seq, encoder_dim), jnp.float32).astype(dtype)

    # Deterministic synthetic parameters (shapes from the module __init__).
    gamma = 1.0 + 0.01 * jax.random.normal(kg, (encoder_dim,), jnp.float32)
    beta = 0.01 * jax.random.normal(kb, (encoder_dim,), jnp.float32)
    w1 = (jax.random.normal(kw1, (encoder_dim, expand_dim), jnp.float32) * 0.05).astype(dtype)
    b1 = jax.random.normal(kb1, (expand_dim,), jnp.float32) * 0.05
    w2 = (jax.random.normal(kw2, (expand_dim, encoder_dim), jnp.float32) * 0.05).astype(dtype)
    b2 = jax.random.normal(kb2, (encoder_dim,), jnp.float32) * 0.05

    out = feed_forward(x, gamma, beta, w1, b1, w2, b2)
    out = jax.block_until_ready(out)

    ref = reference(x, gamma, beta, w1, b1, w2, b2)
    assert out.shape == x.shape
    out_f32 = out.astype(jnp.float32)
    max_err = float(jnp.max(jnp.abs(out_f32 - ref)))
    # bf16 matmul operands + approx reciprocal vs fp32 reference -> loosened tolerance.
    assert jnp.allclose(out_f32, ref, atol=5e-2, rtol=5e-2), (
        f"mismatch vs reference (max abs err {max_err})")

    print("KERNEL_OK")
</pallas_src>

<mosaic_0001>
module attributes {stable_mosaic.version = 11 : i64} {
  func.func @ffn_kernel(%arg0: i32, %arg1: memref<16x128xbf16, #tpu.memory_space<vmem>>, %arg2: memref<1x128xf32, #tpu.memory_space<vmem>>, %arg3: memref<1x128xf32, #tpu.memory_space<vmem>>, %arg4: memref<128x512xbf16, #tpu.memory_space<vmem>>, %arg5: memref<1x512xf32, #tpu.memory_space<vmem>>, %arg6: memref<512x128xbf16, #tpu.memory_space<vmem>>, %arg7: memref<1x128xf32, #tpu.memory_space<vmem>>, %arg8: memref<16x128xbf16, #tpu.memory_space<vmem>>) attributes {dimension_semantics = [#tpu.dimension_semantics<parallel>], iteration_bounds = array<i64: 1>, scalar_prefetch = 0 : i64, scratch_operands = 0 : i64, tpu.core_type = #tpu.core_type<tc>, window_params = [{transform_indices = @transform_0, window_bounds = array<i64: 16, 128>}, {pipeline_mode = #tpu.pipeline_mode<synchronous>, transform_indices = @transform_1, window_bounds = array<i64: 1, 128>}, {pipeline_mode = #tpu.pipeline_mode<synchronous>, transform_indices = @transform_2, window_bounds = array<i64: 1, 128>}, {pipeline_mode = #tpu.pipeline_mode<synchronous>, transform_indices = @transform_3, window_bounds = array<i64: 128, 512>}, {pipeline_mode = #tpu.pipeline_mode<synchronous>, transform_indices = @transform_4, window_bounds = array<i64: 1, 512>}, {pipeline_mode = #tpu.pipeline_mode<synchronous>, transform_indices = @transform_5, window_bounds = array<i64: 512, 128>}, {pipeline_mode = #tpu.pipeline_mode<synchronous>, transform_indices = @transform_6, window_bounds = array<i64: 1, 128>}, {transform_indices = @transform_7, window_bounds = array<i64: 16, 128>}]} {
    %c0 = arith.constant 0 : index
    %c0_0 = arith.constant 0 : index
    %0 = vector.load %arg1[%c0, %c0_0] : memref<16x128xbf16, #tpu.memory_space<vmem>>, vector<16x128xbf16>
    %1 = arith.extf %0 : vector<16x128xbf16> to vector<16x128xf32>
    %cst = arith.constant dense<0.000000e+00> : vector<16xf32>
    %2 = vector.multi_reduction <add>, %1, %cst [1] : vector<16x128xf32> to vector<16xf32>
    %3 = vector.shape_cast %2 : vector<16xf32> to vector<16x1xf32>
    %cst_1 = arith.constant 7.812500e-03 : f32
    %4 = vector.broadcast %cst_1 : f32 to vector<16x1xf32>
    %5 = arith.mulf %3, %4 : vector<16x1xf32>
    %6 = arith.mulf %1, %1 : vector<16x128xf32>
    %cst_2 = arith.constant dense<0.000000e+00> : vector<16xf32>
    %7 = vector.multi_reduction <add>, %6, %cst_2 [1] : vector<16x128xf32> to vector<16xf32>
    %8 = vector.shape_cast %7 : vector<16xf32> to vector<16x1xf32>
    %cst_3 = arith.constant 7.812500e-03 : f32
    %9 = vector.broadcast %cst_3 : f32 to vector<16x1xf32>
    %10 = arith.mulf %8, %9 : vector<16x1xf32>
    %11 = arith.mulf %5, %5 : vector<16x1xf32>
    %12 = arith.subf %10, %11 : vector<16x1xf32>
    %cst_4 = arith.constant 0.000000e+00 : f32
    %13 = vector.broadcast %cst_4 : f32 to vector<16x1xf32>
    %14 = arith.maximumf %12, %13 : vector<16x1xf32>
    %15 = vector.broadcast %5 : vector<16x1xf32> to vector<16x128xf32>
    %16 = arith.subf %1, %15 : vector<16x128xf32>
    %cst_5 = arith.constant 9.99999974E-6 : f32
    %17 = vector.broadcast %cst_5 : f32 to vector<16x1xf32>
    %18 = arith.addf %14, %17 : vector<16x1xf32>
    %19 = math.rsqrt %18 : vector<16x1xf32>
    %20 = vector.broadcast %19 : vector<16x1xf32> to vector<16x128xf32>
    %21 = arith.mulf %16, %20 : vector<16x128xf32>
    %c0_6 = arith.constant 0 : index
    %c0_7 = arith.constant 0 : index
    %22 = vector.load %arg2[%c0_6, %c0_7] : memref<1x128xf32, #tpu.memory_space<vmem>>, vector<1x128xf32>
    %23 = vector.broadcast %22 : vector<1x128xf32> to vector<16x128xf32>
    %24 = arith.mulf %21, %23 : vector<16x128xf32>
    %c0_8 = arith.constant 0 : index
    %c0_9 = arith.constant 0 : index
    %25 = vector.load %arg3[%c0_8, %c0_9] : memref<1x128xf32, #tpu.memory_space<vmem>>, vector<1x128xf32>
    %26 = vector.broadcast %25 : vector<1x128xf32> to vector<16x128xf32>
    %27 = arith.addf %24, %26 : vector<16x128xf32>
    %28 = arith.truncf %27 : vector<16x128xf32> to vector<16x128xbf16>
    %cst_10 = arith.constant 0.000000e+00 : f32
    %29 = vector.broadcast %cst_10 : f32 to vector<16x128xf32>
    %c0_11 = arith.constant 0 : index
    %c0_12 = arith.constant 0 : index
    %30 = vector.load %arg4[%c0_11, %c0_12] : memref<128x512xbf16, #tpu.memory_space<vmem>>, vector<128x512xbf16>
    %cst_13 = arith.constant dense<0.000000e+00> : vector<16x512xf32>
    %31 = tpu.matmul %28, %30, %cst_13 {dimension_numbers = #tpu.dot_dimension_numbers<[1], [0], [0], [1], [0, 0, 1, 1], [], []>} : vector<16x128xbf16>, vector<128x512xbf16>, vector<16x512xf32> -> vector<16x512xf32>
    %c0_14 = arith.constant 0 : index
    %c0_15 = arith.constant 0 : index
    %32 = vector.load %arg5[%c0_14, %c0_15] : memref<1x512xf32, #tpu.memory_space<vmem>>, vector<1x512xf32>
    %33 = vector.broadcast %32 : vector<1x512xf32> to vector<16x512xf32>
    %34 = arith.addf %31, %33 : vector<16x512xf32>
    %cst_16 = arith.constant 0.000000e+00 : f32
    %35 = vector.broadcast %cst_16 : f32 to vector<16x512xf32>
    %36 = arith.subf %35, %34 : vector<16x512xf32>
    %37 = math.exp %36 : vector<16x512xf32>
    %cst_17 = arith.constant 1.000000e+00 : f32
    %38 = vector.broadcast %cst_17 : f32 to vector<16x512xf32>
    %39 = arith.addf %38, %37 : vector<16x512xf32>
    %40 = tpu.reciprocal %39 {approx = true} : vector<16x512xf32> -> vector<16x512xf32>
    %41 = arith.mulf %34, %40 : vector<16x512xf32>
    %42 = arith.truncf %41 : vector<16x512xf32> to vector<16x512xbf16>
    %c0_18 = arith.constant 0 : index
    %c0_19 = arith.constant 0 : index
    %43 = vector.load %arg6[%c0_18, %c0_19] : memref<512x128xbf16, #tpu.memory_space<vmem>>, vector<512x128xbf16>
    %cst_20 = arith.constant dense<0.000000e+00> : vector<16x128xf32>
    %44 = tpu.matmul %42, %43, %cst_20 {dimension_numbers = #tpu.dot_dimension_numbers<[1], [0], [0], [1], [0, 0, 1, 1], [], []>} : vector<16x512xbf16>, vector<512x128xbf16>, vector<16x128xf32> -> vector<16x128xf32>
    %45 = arith.addf %29, %44 : vector<16x128xf32>
    %c0_21 = arith.constant 0 : index
    %c0_22 = arith.constant 0 : index
    %46 = vector.load %arg7[%c0_21, %c0_22] : memref<1x128xf32, #tpu.memory_space<vmem>>, vector<1x128xf32>
    %47 = vector.broadcast %46 : vector<1x128xf32> to vector<16x128xf32>
    %48 = arith.addf %45, %47 : vector<16x128xf32>
    %49 = arith.truncf %48 : vector<16x128xf32> to vector<16x128xbf16>
    %c0_23 = arith.constant 0 : index
    %c0_24 = arith.constant 0 : index
    %50 = vector.load %arg8[%c0_23, %c0_24] : memref<16x128xbf16, #tpu.memory_space<vmem>>, vector<16x128xbf16>
    tpu.vector_store %arg8[%c0_23, %c0_24], %49 {strides = array<i32>} : memref<16x128xbf16, #tpu.memory_space<vmem>>, vector<16x128xbf16>,
    return
  }
  func.func @transform_0(%arg0: i32) -> (i32, i32) {
    %c0_i32 = arith.constant 0 : i32
    %c0_i32_0 = arith.constant 0 : i32
    return %arg0, %c0_i32 : i32, i32
  }
  func.func @transform_1(%arg0: i32) -> (i32, i32) {
    %c0_i32 = arith.constant 0 : i32
    %c0_i32_0 = arith.constant 0 : i32
    %c0_i32_1 = arith.constant 0 : i32
    return %c0_i32, %c0_i32_0 : i32, i32
  }
  func.func @transform_2(%arg0: i32) -> (i32, i32) {
    %c0_i32 = arith.constant 0 : i32
    %c0_i32_0 = arith.constant 0 : i32
    %c0_i32_1 = arith.constant 0 : i32
    return %c0_i32, %c0_i32_0 : i32, i32
  }
  func.func @transform_3(%arg0: i32) -> (i32, i32) {
    %c0_i32 = arith.constant 0 : i32
    %c0_i32_0 = arith.constant 0 : i32
    %c0_i32_1 = arith.constant 0 : i32
    return %c0_i32, %c0_i32_0 : i32, i32
  }
  func.func @transform_4(%arg0: i32) -> (i32, i32) {
    %c0_i32 = arith.constant 0 : i32
    %c0_i32_0 = arith.constant 0 : i32
    %c0_i32_1 = arith.constant 0 : i32
    return %c0_i32, %c0_i32_0 : i32, i32
  }
  func.func @transform_5(%arg0: i32) -> (i32, i32) {
    %c0_i32 = arith.constant 0 : i32
    %c0_i32_0 = arith.constant 0 : i32
    %c0_i32_1 = arith.constant 0 : i32
    return %c0_i32, %c0_i32_0 : i32, i32
  }
  func.func @transform_6(%arg0: i32) -> (i32, i32) {
    %c0_i32 = arith.constant 0 : i32
    %c0_i32_0 = arith.constant 0 : i32
    %c0_i32_1 = arith.constant 0 : i32
    return %c0_i32, %c0_i32_0 : i32, i32
  }
  func.func @transform_7(%arg0: i32) -> (i32, i32) {
    %c0_i32 = arith.constant 0 : i32
    %c0_i32_0 = arith.constant 0 : i32
    return %arg0, %c0_i32 : i32, i32
  }
}

</mosaic_0001>

<llo_original>
// kernel: tpu_custom_call.1
$region0: #{tpu_custom_call.1}
  #allocation0 [shape = 'u32[]', space=smem, size = 0x4, offset = 0x4, fixed_abs, tag = 'smem constant byte address 0x4 - core index']
  #allocation1 [shape = 'u32[144,128]{1,0:T(1,128)}', space=vmem, size = 0x12000, scoped, tag = 'internal scratch']
  %s0 = inlined_call_operand.hbm [shape: bf16[16,128], index: 0, kind: input, shape index: {}]
  %s1 = inlined_call_operand.vmem [shape: f32[1,128], index: 1, kind: input, shape index: {}]
  %s2 = inlined_call_operand.vmem [shape: f32[1,128], index: 2, kind: input, shape index: {}]
  %s3 = inlined_call_operand.hbm [shape: bf16[128,512], index: 3, kind: input, shape index: {}]
  %s4 = inlined_call_operand.vmem [shape: f32[1,512], index: 4, kind: input, shape index: {}]
  %s5 = inlined_call_operand.hbm [shape: bf16[512,128], index: 5, kind: input, shape index: {}]
  %s6 = inlined_call_operand.vmem [shape: f32[1,128], index: 6, kind: input, shape index: {}]
  %s7 = inlined_call_operand.hbm [shape: bf16[16,128], index: 7, kind: output, shape index: {}]
  %s8 = sld [smem:[#allocation0]]
  $region50: #{tpu_custom_call.1} parent=0
    _
  %s10 = ssub.s32 1, %s8
  %s11 = scalar_select 0, %s10, %s8
  $region1: #{tpu_custom_call.1} parent=0
    #allocation2 [shape = 'u8[4096]{0}', space=vmem, size = 0x1000, scoped, tag = 'input window, operand 0, single buffered']
    #allocation3 [shape = 's32[1]{0}', space=sflag, size = 0x4, scoped, tag = 'scoped memory for tpu_custom_call.1']
    #allocation4 [shape = 's32[1]{0}', space=sflag, size = 0x4, scoped, tag = 'scoped memory for tpu_custom_call.1']
    #allocation5 [shape = 'u8[131072]{0}', space=vmem, size = 0x20000, scoped, tag = 'input window, operand 3, single buffered']
    #allocation6 [shape = 's32[1]{0}', space=sflag, size = 0x4, scoped, tag = 'scoped memory for tpu_custom_call.1']
    #allocation7 [shape = 'u8[131072]{0}', space=vmem, size = 0x20000, scoped, tag = 'input window, operand 5, single buffered']
    #allocation8 [shape = 'u8[4096]{0}', space=vmem, size = 0x1000, scoped, tag = 'output window, operand 0, single buffered']
    %12 = vsyncpa [#allocation3], 0
    %13 = vsyncpa [#allocation6], 0
    %14 = vsyncpa [#allocation4], 0
    // Predicated region
    $region2: #{tpu_custom_call.1} parent=1 // pred_check
      _
    $region3: #{tpu_custom_call.1} parent=1 // pred_check_branch
      %16 = sbr.rel (0) target = $region5
    $region4: #{tpu_custom_call.1} parent=1 // pred_region
      %s18 = ssub.s32 128, 128
      %19 = vsyncadd [#allocation3], %s18
      %s20 = sshll.u32 [#allocation2], 4
      %s21 = int_to_ptr.vmem [resolvable:$true] %s20
      %26 = dma.hbm_to_vmem [thread:$0]  %s0, 128, %s21, [#allocation3], 64, 64, 4
    $region5: #{tpu_custom_call.1} parent=1 // pred_fallthru
      _
    // Predicated region
    $region6: #{tpu_custom_call.1} parent=1 // pred_check
      _
    $region7: #{tpu_custom_call.1} parent=1 // pred_check_branch
      %28 = sbr.rel (0) target = $region9
    $region8: #{tpu_custom_call.1} parent=1 // pred_region
      _
    $region9: #{tpu_custom_call.1} parent=1 // pred_fallthru
      _
    // Predicated region
    $region10: #{tpu_custom_call.1} parent=1 // pred_check
      _
    $region11: #{tpu_custom_call.1} parent=1 // pred_check_branch
      %30 = sbr.rel (0) target = $region13
    $region12: #{tpu_custom_call.1} parent=1 // pred_region
      _
    $region13: #{tpu_custom_call.1} parent=1 // pred_fallthru
      _
    // Predicated region
    $region14: #{tpu_custom_call.1} parent=1 // pred_check
      _
    $region15: #{tpu_custom_call.1} parent=1 // pred_check_branch
      %32 = sbr.rel (0) target = $region17
    $region16: #{tpu_custom_call.1} parent=1 // pred_region
      %s34 = ssub.s32 4096, 4096
      %35 = vsyncadd [#allocation6], %s34
      %s36 = sshll.u32 [#allocation5], 4
      %s37 = int_to_ptr.vmem [resolvable:$true] %s36
      %42 = dma.hbm_to_vmem [thread:$0]  %s3, 4096, %s37, [#allocation6], 256, 256, 16
    $region17: #{tpu_custom_call.1} parent=1 // pred_fallthru
      _
    // Predicated region
    $region18: #{tpu_custom_call.1} parent=1 // pred_check
      _
    $region19: #{tpu_custom_call.1} parent=1 // pred_check_branch
      %44 = sbr.rel (0) target = $region21
    $region20: #{tpu_custom_call.1} parent=1 // pred_region
      _
    $region21: #{tpu_custom_call.1} parent=1 // pred_fallthru
      _
    // Predicated region
    $region22: #{tpu_custom_call.1} parent=1 // pred_check
      _
    $region23: #{tpu_custom_call.1} parent=1 // pred_check_branch
      %46 = sbr.rel (0) target = $region25
    $region24: #{tpu_custom_call.1} parent=1 // pred_region
      %s48 = ssub.s32 4096, 4096
      %49 = vsyncadd [#allocation6], %s48
      %s50 = sshll.u32 [#allocation7], 4
      %s51 = int_to_ptr.vmem [resolvable:$true] %s50
      %56 = dma.hbm_to_vmem [thread:$0]  %s5, 4096, %s51, [#allocation6], 64, 64, 4
    $region25: #{tpu_custom_call.1} parent=1 // pred_fallthru
      _
    // Predicated region
    $region26: #{tpu_custom_call.1} parent=1 // pred_check
      _
    $region27: #{tpu_custom_call.1} parent=1 // pred_check_branch
      %58 = sbr.rel (0) target = $region29
    $region28: #{tpu_custom_call.1} parent=1 // pred_region
      _
    $region29: #{tpu_custom_call.1} parent=1 // pred_fallthru
      _
    // Predicated region
    $region30: #{tpu_custom_call.1} parent=1 // pred_check
      _
    $region31: #{tpu_custom_call.1} parent=1 // pred_check_branch
      %60 = sbr.rel (0) target = $region33
    $region32: #{tpu_custom_call.1} parent=1 // pred_region
      %61 = dma.done [#allocation3], 128
    $region33: #{tpu_custom_call.1} parent=1 // pred_fallthru
      _
    // Predicated region
    $region34: #{tpu_custom_call.1} parent=1 // pred_check
      _
    $region35: #{tpu_custom_call.1} parent=1 // pred_check_branch
      %63 = sbr.rel (0) target = $region37
    $region36: #{tpu_custom_call.1} parent=1 // pred_region
      %64 = dma.done [#allocation6], 4096
    $region37: #{tpu_custom_call.1} parent=1 // pred_fallthru
      _
    // Predicated region
    $region38: #{tpu_custom_call.1} parent=1 // pred_check
      _
    $region39: #{tpu_custom_call.1} parent=1 // pred_check_branch
      %66 = sbr.rel (0) target = $region41
    $region40: #{tpu_custom_call.1} parent=1 // pred_region
      %67 = dma.done [#allocation6], 4096
    $region41: #{tpu_custom_call.1} parent=1 // pred_fallthru
      _
    %v69 = vld [vmem:[#allocation2] sm:$0xf]
    %v70 = vld [vmem:[#allocation2 + $0x4] sm:$0xf]
    %v71 = vunpack.c.l.bf16 %v69
    %v72 = vunpack.c.l.bf16 %v70
    %73 = vadd.xlane.f32.xlu0 %v71
    %v74 = vpop.xlane.xlu0 %73
    %75 = vadd.xlane.f32.xlu0 %v72
    %v76 = vpop.xlane.xlu0 %75
    %v77 = vmul.f32 %v74, 0.0078125
    %v78 = vmul.f32 %v76, 0.0078125
    %v79 = vmul.f32 %v71, %v71
    %v80 = vmul.f32 %v72, %v72
    %81 = vadd.xlane.f32.xlu0 %v79
    %v82 = vpop.xlane.xlu0 %81
    %83 = vadd.xlane.f32.xlu0 %v80
    %v84 = vpop.xlane.xlu0 %83
    %v85 = vmul.f32 %v82, 0.0078125
    %v86 = vmul.f32 %v84, 0.0078125
    %v87 = vmul.f32 %v77, %v77
    %v88 = vmul.f32 %v78, %v78
    %v89 = vsub.f32 %v85, %v87
    %v90 = vsub.f32 %v86, %v88
    %v91 = vmax.f32 %v89, 0.0
    %v92 = vmax.f32 %v90, 0.0
    %v93 = vsub.f32 %v71, %v77
    %v94 = vsub.f32 %v72, %v78
    %v95 = vadd.f32 %v91, 1e-05
    %v96 = vadd.f32 %v92, 1e-05
    %v97 = vrsqrt.pop %v95
    %v98 = vrsqrt.pop %v96
    %v99 = vmul.f32 %v93, %v97
    %v100 = vmul.f32 %v94, %v98
    %v101 = vld [vmem:[%s1] sm:$0x1]
    %v103 = vlaneseq
    %v104 = vshrl.u32 %v103, 7
    %v105 = vsub.s32 0, %v104
    %v106 = vrot.slane %v101, %v105
    %v108 = vmul.f32 %v99, %v106
    %v109 = vmul.f32 %v100, %v106
    %v110 = vld [vmem:[%s2] sm:$0x1]
    %v112 = vlaneseq
    %v113 = vshrl.u32 %v112, 7
    %v114 = vsub.s32 0, %v113
    %v115 = vrot.slane %v110, %v114
    %v117 = vadd.f32 %v108, %v115
    %v118 = vadd.f32 %v109, %v115
    %v119 = vpack.c.bf16 %v118, %v117
    %v120 = vld [vmem:[#allocation5] sm:$0xff]
    %v121 = vld [vmem:[#allocation5 + $0x8] sm:$0xff]
    %v122 = vld [vmem:[#allocation5 + $0x10] sm:$0xff]
    %v123 = vld [vmem:[#allocation5 + $0x18] sm:$0xff]
    %v124 = vld [vmem:[#allocation5 + $0x20] sm:$0xff]
    %v125 = vld [vmem:[#allocation5 + $0x28] sm:$0xff]
    %v126 = vld [vmem:[#allocation5 + $0x30] sm:$0xff]
    %v127 = vld [vmem:[#allocation5 + $0x38] sm:$0xff]
    %v128 = vld [vmem:[#allocation5 + $0x40] sm:$0xff]
    %v129 = vld [vmem:[#allocation5 + $0x48] sm:$0xff]
    %v130 = vld [vmem:[#allocation5 + $0x50] sm:$0xff]
    %v131 = vld [vmem:[#allocation5 + $0x58] sm:$0xff]
    %v132 = vld [vmem:[#allocation5 + $0x60] sm:$0xff]
    %v133 = vld [vmem:[#allocation5 + $0x68] sm:$0xff]
    %v134 = vld [vmem:[#allocation5 + $0x70] sm:$0xff]
    %v135 = vld [vmem:[#allocation5 + $0x78] sm:$0xff]
    %v136 = vld [vmem:[#allocation5 + $0x80] sm:$0xff]
    %v137 = vld [vmem:[#allocation5 + $0x88] sm:$0xff]
    %v138 = vld [vmem:[#allocation5 + $0x90] sm:$0xff]
    %v139 = vld [vmem:[#allocation5 + $0x98] sm:$0xff]
    %v140 = vld [vmem:[#allocation5 + $0xa0] sm:$0xff]
    %v141 = vld [vmem:[#allocation5 + $0xa8] sm:$0xff]
    %v142 = vld [vmem:[#allocation5 + $0xb0] sm:$0xff]
    %v143 = vld [vmem:[#allocation5 + $0xb8] sm:$0xff]
    %v144 = vld [vmem:[#allocation5 + $0xc0] sm:$0xff]
    %v145 = vld [vmem:[#allocation5 + $0xc8] sm:$0xff]
    %v146 = vld [vmem:[#allocation5 + $0xd0] sm:$0xff]
    %v147 = vld [vmem:[#allocation5 + $0xd8] sm:$0xff]
    %v148 = vld [vmem:[#allocation5 + $0xe0] sm:$0xff]
    %v149 = vld [vmem:[#allocation5 + $0xe8] sm:$0xff]
    %v150 = vld [vmem:[#allocation5 + $0xf0] sm:$0xff]
    %v151 = vld [vmem:[#allocation5 + $0xf8] sm:$0xff]
    %v152 = vld [vmem:[%s4] sm:$0xf]
    %v154 = vlaneseq
    %v155 = vshrl.u32 %v154, 7
    %v156 = vsub.s32 0, %v155
    %v157 = vrot.slane %v152, %v156
    %v158 = vlaneseq
    %v159 = vshrl.u32 %v158, 7
    %v160 = vsub.s32 1, %v159
    %v161 = vrot.slane %v152, %v160
    %v162 = vlaneseq
    %v163 = vshrl.u32 %v162, 7
    %v164 = vsub.s32 2, %v163
    %v165 = vrot.slane %v152, %v164
    %v166 = vlaneseq
    %v167 = vshrl.u32 %v166, 7
    %v168 = vsub.s32 3, %v167
    %v169 = vrot.slane %v152, %v168
    %v206 = vunpack.c.l.b16 %v120
    %v207 = vunpack.c.h.b16 %v120
    %v208 = vunpack.c.l.b16 %v121
    %v209 = vunpack.c.h.b16 %v121
    %v210 = vunpack.c.l.b16 %v122
    %v211 = vunpack.c.h.b16 %v122
    %v212 = vunpack.c.l.b16 %v123
    %v213 = vunpack.c.h.b16 %v123
    %v214 = vunpack.c.l.b16 %v124
    %v215 = vunpack.c.h.b16 %v124
    %v216 = vunpack.c.l.b16 %v125
    %v217 = vunpack.c.h.b16 %v125
    %v218 = vunpack.c.l.b16 %v126
    %v219 = vunpack.c.h.b16 %v126
    %v220 = vunpack.c.l.b16 %v127
    %v221 = vunpack.c.h.b16 %v127
    %v222 = vunpack.c.l.b16 %v128
    %v223 = vunpack.c.h.b16 %v128
    %v224 = vunpack.c.l.b16 %v129
    %v225 = vunpack.c.h.b16 %v129
    %v226 = vunpack.c.l.b16 %v130
    %v227 = vunpack.c.h.b16 %v130
    %v228 = vunpack.c.l.b16 %v131
    %v229 = vunpack.c.h.b16 %v131
    %v230 = vunpack.c.l.b16 %v132
    %v231 = vunpack.c.h.b16 %v132
    %v232 = vunpack.c.l.b16 %v133
    %v233 = vunpack.c.h.b16 %v133
    %v234 = vunpack.c.l.b16 %v134
    %v235 = vunpack.c.h.b16 %v134
    %v236 = vunpack.c.l.b16 %v135
    %v237 = vunpack.c.h.b16 %v135
    %v238 = vunpack.c.l.b16 %v136
    %v239 = vunpack.c.h.b16 %v136
    %v240 = vunpack.c.l.b16 %v137
    %v241 = vunpack.c.h.b16 %v137
    %v242 = vunpack.c.l.b16 %v138
    %v243 = vunpack.c.h.b16 %v138
    %v244 = vunpack.c.l.b16 %v139
    %v245 = vunpack.c.h.b16 %v139
    %v246 = vunpack.c.l.b16 %v140
    %v247 = vunpack.c.h.b16 %v140
    %v248 = vunpack.c.l.b16 %v141
    %v249 = vunpack.c.h.b16 %v141
    %v250 = vunpack.c.l.b16 %v142
    %v251 = vunpack.c.h.b16 %v142
    %v252 = vunpack.c.l.b16 %v143
    %v253 = vunpack.c.h.b16 %v143
    %v254 = vunpack.c.l.b16 %v144
    %v255 = vunpack.c.h.b16 %v144
    %v256 = vunpack.c.l.b16 %v145
    %v257 = vunpack.c.h.b16 %v145
    %v258 = vunpack.c.l.b16 %v146
    %v259 = vunpack.c.h.b16 %v146
    %v260 = vunpack.c.l.b16 %v147
    %v261 = vunpack.c.h.b16 %v147
    %v262 = vunpack.c.l.b16 %v148
    %v263 = vunpack.c.h.b16 %v148
    %v264 = vunpack.c.l.b16 %v149
    %v265 = vunpack.c.h.b16 %v149
    %v266 = vunpack.c.l.b16 %v150
    %v267 = vunpack.c.h.b16 %v150
    %v268 = vunpack.c.l.b16 %v151
    %v269 = vunpack.c.h.b16 %v151
    %v270 = vpack.c.b16 %v210, %v206
    %v271 = vpack.c.b16 %v211, %v207
    %v272 = vpack.c.b16 %v212, %v208
    %v273 = vpack.c.b16 %v213, %v209
    %v274 = vpack.c.b16 %v218, %v214
    %v275 = vpack.c.b16 %v219, %v215
    %v276 = vpack.c.b16 %v220, %v216
    %v277 = vpack.c.b16 %v221, %v217
    %v278 = vpack.c.b16 %v226, %v222
    %v279 = vpack.c.b16 %v227, %v223
    %v280 = vpack.c.b16 %v228, %v224
    %v281 = vpack.c.b16 %v229, %v225
    %v282 = vpack.c.b16 %v234, %v230
    %v283 = vpack.c.b16 %v235, %v231
    %v284 = vpack.c.b16 %v236, %v232
    %v285 = vpack.c.b16 %v237, %v233
    %v286 = vpack.c.b16 %v242, %v238
    %v287 = vpack.c.b16 %v243, %v239
    %v288 = vpack.c.b16 %v244, %v240
    %v289 = vpack.c.b16 %v245, %v241
    %v290 = vpack.c.b16 %v250, %v246
    %v291 = vpack.c.b16 %v251, %v247
    %v292 = vpack.c.b16 %v252, %v248
    %v293 = vpack.c.b16 %v253, %v249
    %v294 = vpack.c.b16 %v258, %v254
    %v295 = vpack.c.b16 %v259, %v255
    %v296 = vpack.c.b16 %v260, %v256
    %v297 = vpack.c.b16 %v261, %v257
    %v298 = vpack.c.b16 %v266, %v262
    %v299 = vpack.c.b16 %v267, %v263
    %v300 = vpack.c.b16 %v268, %v264
    %v301 = vpack.c.b16 %v269, %v265
    %334 = vmatprep.subr.bf16.mxu0 %v271
    %335 = vmatpush1.bf16.msra.mxu0 %v270
    %336 = vmatprep.subr.bf16.mxu0 %v275
    %337 = vmatpush1.bf16.msra.mxu0 %v274
    %338 = vmatprep.subr.bf16.mxu0 %v279
    %339 = vmatpush1.bf16.msra.mxu0 %v278
    %340 = vmatprep.subr.bf16.mxu0 %v283
    %341 = vmatpush1.bf16.msra.mxu0 %v282
    %342 = vmatprep.subr.bf16.mxu0 %v287
    %343 = vmatpush1.bf16.msra.mxu0 %v286
    %344 = vmatprep.subr.bf16.mxu0 %v291
    %345 = vmatpush1.bf16.msra.mxu0 %v290
    %346 = vmatprep.subr.bf16.mxu0 %v295
    %347 = vmatpush1.bf16.msra.mxu0 %v294
    %348 = vmatprep.subr.bf16.mxu0 %v299
    %349 = vmatpush1.bf16.msra.mxu0 %v298
    %350 = vmatprep.subr.bf16.mxu0 0
    %351 = vmatpush1.bf16.msra.mxu0 0
    %352 = vmatprep.subr.bf16.mxu0 0
    %353 = vmatpush1.bf16.msra.mxu0 0
    %354 = vmatprep.subr.bf16.mxu0 0
    %355 = vmatpush1.bf16.msra.mxu0 0
    %356 = vmatprep.subr.bf16.mxu0 0
    %357 = vmatpush1.bf16.msra.mxu0 0
    %358 = vmatprep.subr.bf16.mxu0 0
    %359 = vmatpush1.bf16.msra.mxu0 0
    %360 = vmatprep.subr.bf16.mxu0 0
    %361 = vmatpush1.bf16.msra.mxu0 0
    %362 = vmatprep.subr.bf16.mxu0 0
    %363 = vmatpush1.bf16.msra.mxu0 0
    %364 = vmatprep.subr.bf16.mxu0 0
    %365 = vmatpush1.bf16.msra.mxu0 0
    %366 = vmatprep.mubr.bf16.mxu0 0
    %367 = vmatmul.mubr.bf16.gmra.mrb[0].mxu0 %v119
    %v368 = vpop.f32.mrb[0].mxu0
    %v369 = vadd.f32 %v157, %v368
    %v370 = vpop.f32.mrb[0].mxu0
    %v371 = vadd.f32 %v161, %v370
    %v372 = vpop.f32.mrb[0].mxu0
    %v373 = vadd.f32 %v157, %v372
    %v374 = vpop.f32.mrb[0].mxu0
    %v375 = vadd.f32 %v161, %v374
    %376 = vdwg.mxu0
    %377 = vmatprep.subr.bf16.mxu0 %v273
    %378 = vmatpush1.bf16.msra.mxu0 %v272
    %379 = vmatprep.subr.bf16.mxu0 %v277
    %380 = vmatpush1.bf16.msra.mxu0 %v276
    %381 = vmatprep.subr.bf16.mxu0 %v281
    %382 = vmatpush1.bf16.msra.mxu0 %v280
    %383 = vmatprep.subr.bf16.mxu0 %v285
    %384 = vmatpush1.bf16.msra.mxu0 %v284
    %385 = vmatprep.subr.bf16.mxu0 %v289
    %386 = vmatpush1.bf16.msra.mxu0 %v288
    %387 = vmatprep.subr.bf16.mxu0 %v293
    %388 = vmatpush1.bf16.msra.mxu0 %v292
    %389 = vmatprep.subr.bf16.mxu0 %v297
    %390 = vmatpush1.bf16.msra.mxu0 %v296
    %391 = vmatprep.subr.bf16.mxu0 %v301
    %392 = vmatpush1.bf16.msra.mxu0 %v300
    %393 = vmatprep.subr.bf16.mxu0 0
    %394 = vmatpush1.bf16.msra.mxu0 0
    %395 = vmatprep.subr.bf16.mxu0 0
    %396 = vmatpush1.bf16.msra.mxu0 0
    %397 = vmatprep.subr.bf16.mxu0 0
    %398 = vmatpush1.bf16.msra.mxu0 0
    %399 = vmatprep.subr.bf16.mxu0 0
    %400 = vmatpush1.bf16.msra.mxu0 0
    %401 = vmatprep.subr.bf16.mxu0 0
    %402 = vmatpush1.bf16.msra.mxu0 0
    %403 = vmatprep.subr.bf16.mxu0 0
    %404 = vmatpush1.bf16.msra.mxu0 0
    %405 = vmatprep.subr.bf16.mxu0 0
    %406 = vmatpush1.bf16.msra.mxu0 0
    %407 = vmatprep.subr.bf16.mxu0 0
    %408 = vmatpush1.bf16.msra.mxu0 0
    %409 = vmatprep.mubr.bf16.mxu0 0
    %410 = vmatmul.mubr.bf16.gmra.mrb[0].mxu0 %v119
    %v411 = vpop.f32.mrb[0].mxu0
    %v412 = vadd.f32 %v165, %v411
    %v413 = vpop.f32.mrb[0].mxu0
    %v414 = vadd.f32 %v169, %v413
    %v415 = vpop.f32.mrb[0].mxu0
    %v416 = vadd.f32 %v165, %v415
    %v417 = vpop.f32.mrb[0].mxu0
    %v418 = vadd.f32 %v169, %v417
    %419 = vdwg.mxu0
    %v420 = vsub.f32 0.0, %v369
    %v421 = vsub.f32 0.0, %v371
    %v422 = vsub.f32 0.0, %v412
    %v423 = vsub.f32 0.0, %v414
    %v424 = vsub.f32 0.0, %v373
    %v425 = vsub.f32 0.0, %v375
    %v426 = vsub.f32 0.0, %v416
    %v427 = vsub.f32 0.0, %v418
    %v428 = vmul.f32 %v420, 1.442695
    %v429 = vpow.pop %v428
    %v430 = vmul.f32 %v421, 1.442695
    %v431 = vpow.pop %v430
    %v432 = vmul.f32 %v422, 1.442695
    %v433 = vpow.pop %v432
    %v434 = vmul.f32 %v423, 1.442695
    %v435 = vpow.pop %v434
    %v436 = vmul.f32 %v424, 1.442695
    %v437 = vpow.pop %v436
    %v438 = vmul.f32 %v425, 1.442695
    %v439 = vpow.pop %v438
    %v440 = vmul.f32 %v426, 1.442695
    %v441 = vpow.pop %v440
    %v442 = vmul.f32 %v427, 1.442695
    %v443 = vpow.pop %v442
    %v444 = vadd.f32 %v429, 1.0
    %v445 = vadd.f32 %v431, 1.0
    %v446 = vadd.f32 %v433, 1.0
    %v447 = vadd.f32 %v435, 1.0
    %v448 = vadd.f32 %v437, 1.0
    %v449 = vadd.f32 %v439, 1.0
    %v450 = vadd.f32 %v441, 1.0
    %v451 = vadd.f32 %v443, 1.0
    %v452 = vrcp.pop %v444
    %v453 = vrcp.pop %v445
    %v454 = vrcp.pop %v446
    %v455 = vrcp.pop %v447
    %v456 = vrcp.pop %v448
    %v457 = vrcp.pop %v449
    %v458 = vrcp.pop %v450
    %v459 = vrcp.pop %v451
    %v460 = vmul.f32 %v369, %v452
    %v461 = vmul.f32 %v371, %v453
    %v462 = vmul.f32 %v412, %v454
    %v463 = vmul.f32 %v414, %v455
    %v464 = vmul.f32 %v373, %v456
    %v465 = vmul.f32 %v375, %v457
    %v466 = vmul.f32 %v416, %v458
    %v467 = vmul.f32 %v418, %v459
    %v468 = vpack.c.bf16 %v464, %v460
    %v469 = vpack.c.bf16 %v465, %v461
    %v470 = vpack.c.bf16 %v466, %v462
    %v471 = vpack.c.bf16 %v467, %v463
    %v472 = vld [vmem:[#allocation7] sm:$0xf]
    %v473 = vld [vmem:[#allocation7 + $0x4] sm:$0xf]
    %v474 = vld [vmem:[#allocation7 + $0x8] sm:$0xf]
    %v475 = vld [vmem:[#allocation7 + $0xc] sm:$0xf]
    %v476 = vld [vmem:[#allocation7 + $0x10] sm:$0xf]
    %v477 = vld [vmem:[#allocation7 + $0x14] sm:$0xf]
    %v478 = vld [vmem:[#allocation7 + $0x18] sm:$0xf]
    %v479 = vld [vmem:[#allocation7 + $0x1c] sm:$0xf]
    %v480 = vld [vmem:[#allocation7 + $0x20] sm:$0xf]
    %v481 = vld [vmem:[#allocation7 + $0x24] sm:$0xf]
    %v482 = vld [vmem:[#allocation7 + $0x28] sm:$0xf]
    %v483 = vld [vmem:[#allocation7 + $0x2c] sm:$0xf]
    %v484 = vld [vmem:[#allocation7 + $0x30] sm:$0xf]
    %v485 = vld [vmem:[#allocation7 + $0x34] sm:$0xf]
    %v486 = vld [vmem:[#allocation7 + $0x38] sm:$0xf]
    %v487 = vld [vmem:[#allocation7 + $0x3c] sm:$0xf]
    %v488 = vld [vmem:[#allocation7 + $0x40] sm:$0xf]
    %v489 = vld [vmem:[#allocation7 + $0x44] sm:$0xf]
    %v490 = vld [vmem:[#allocation7 + $0x48] sm:$0xf]
    %v491 = vld [vmem:[#allocation7 + $0x4c] sm:$0xf]
    %v492 = vld [vmem:[#allocation7 + $0x50] sm:$0xf]
    %v493 = vld [vmem:[#allocation7 + $0x54] sm:$0xf]
    %v494 = vld [vmem:[#allocation7 + $0x58] sm:$0xf]
    %v495 = vld [vmem:[#allocation7 + $0x5c] sm:$0xf]
    %v496 = vld [vmem:[#allocation7 + $0x60] sm:$0xf]
    %v497 = vld [vmem:[#allocation7 + $0x64] sm:$0xf]
    %v498 = vld [vmem:[#allocation7 + $0x68] sm:$0xf]
    %v499 = vld [vmem:[#allocation7 + $0x6c] sm:$0xf]
    %v500 = vld [vmem:[#allocation7 + $0x70] sm:$0xf]
    %v501 = vld [vmem:[#allocation7 + $0x74] sm:$0xf]
    %v502 = vld [vmem:[#allocation7 + $0x78] sm:$0xf]
    %v503 = vld [vmem:[#allocation7 + $0x7c] sm:$0xf]
    %v504 = vld [vmem:[#allocation7 + $0x80] sm:$0xf]
    %v505 = vld [vmem:[#allocation7 + $0x84] sm:$0xf]
    %v506 = vld [vmem:[#allocation7 + $0x88] sm:$0xf]
    %v507 = vld [vmem:[#allocation7 + $0x8c] sm:$0xf]
    %v508 = vld [vmem:[#allocation7 + $0x90] sm:$0xf]
    %v509 = vld [vmem:[#allocation7 + $0x94] sm:$0xf]
    %v510 = vld [vmem:[#allocation7 + $0x98] sm:$0xf]
    %v511 = vld [vmem:[#allocation7 + $0x9c] sm:$0xf]
    %v512 = vld [vmem:[#allocation7 + $0xa0] sm:$0xf]
    %v513 = vld [vmem:[#allocation7 + $0xa4] sm:$0xf]
    %v514 = vld [vmem:[#allocation7 + $0xa8] sm:$0xf]
    %v515 = vld [vmem:[#allocation7 + $0xac] sm:$0xf]
    %v516 = vld [vmem:[#allocation7 + $0xb0] sm:$0xf]
    %v517 = vld [vmem:[#allocation7 + $0xb4] sm:$0xf]
    %v518 = vld [vmem:[#allocation7 + $0xb8] sm:$0xf]
    %v519 = vld [vmem:[#allocation7 + $0xbc] sm:$0xf]
    %v520 = vld [vmem:[#allocation7 + $0xc0] sm:$0xf]
    %v521 = vld [vmem:[#allocation7 + $0xc4] sm:$0xf]
    %v522 = vld [vmem:[#allocation7 + $0xc8] sm:$0xf]
    %v523 = vld [vmem:[#allocation7 + $0xcc] sm:$0xf]
    %v524 = vld [vmem:[#allocation7 + $0xd0] sm:$0xf]
    %v525 = vld [vmem:[#allocation7 + $0xd4] sm:$0xf]
    %v526 = vld [vmem:[#allocation7 + $0xd8] sm:$0xf]
    %v527 = vld [vmem:[#allocation7 + $0xdc] sm:$0xf]
    %v528 = vld [vmem:[#allocation7 + $0xe0] sm:$0xf]
    %v529 = vld [vmem:[#allocation7 + $0xe4] sm:$0xf]
    %v530 = vld [vmem:[#allocation7 + $0xe8] sm:$0xf]
    %v531 = vld [vmem:[#allocation7 + $0xec] sm:$0xf]
    %v532 = vld [vmem:[#allocation7 + $0xf0] sm:$0xf]
    %v533 = vld [vmem:[#allocation7 + $0xf4] sm:$0xf]
    %v534 = vld [vmem:[#allocation7 + $0xf8] sm:$0xf]
    %v535 = vld [vmem:[#allocation7 + $0xfc] sm:$0xf]
    %v536 = vld [vmem:[%s6] sm:$0x1]
    %v538 = vlaneseq
    %v539 = vshrl.u32 %v538, 7
    %v540 = vsub.s32 0, %v539
    %v541 = vrot.slane %v536, %v540
    %v607 = vunpack.c.l.b16 %v472
    %v608 = vunpack.c.l.b16 %v473
    %v609 = vunpack.c.l.b16 %v474
    %v610 = vunpack.c.l.b16 %v475
    %v611 = vunpack.c.l.b16 %v476
    %v612 = vunpack.c.l.b16 %v477
    %v613 = vunpack.c.l.b16 %v478
    %v614 = vunpack.c.l.b16 %v479
    %v615 = vunpack.c.l.b16 %v480
    %v616 = vunpack.c.l.b16 %v481
    %v617 = vunpack.c.l.b16 %v482
    %v618 = vunpack.c.l.b16 %v483
    %v619 = vunpack.c.l.b16 %v484
    %v620 = vunpack.c.l.b16 %v485
    %v621 = vunpack.c.l.b16 %v486
    %v622 = vunpack.c.l.b16 %v487
    %v623 = vunpack.c.l.b16 %v488
    %v624 = vunpack.c.l.b16 %v489
    %v625 = vunpack.c.l.b16 %v490
    %v626 = vunpack.c.l.b16 %v491
    %v627 = vunpack.c.l.b16 %v492
    %v628 = vunpack.c.l.b16 %v493
    %v629 = vunpack.c.l.b16 %v494
    %v630 = vunpack.c.l.b16 %v495
    %v631 = vunpack.c.l.b16 %v496
    %v632 = vunpack.c.l.b16 %v497
    %v633 = vunpack.c.l.b16 %v498
    %v634 = vunpack.c.l.b16 %v499
    %v635 = vunpack.c.l.b16 %v500
    %v636 = vunpack.c.l.b16 %v501
    %v637 = vunpack.c.l.b16 %v502
    %v638 = vunpack.c.l.b16 %v503
    %v639 = vunpack.c.l.b16 %v504
    %v640 = vunpack.c.l.b16 %v505
    %v641 = vunpack.c.l.b16 %v506
    %v642 = vunpack.c.l.b16 %v507
    %v643 = vunpack.c.l.b16 %v508
    %v644 = vunpack.c.l.b16 %v509
    %v645 = vunpack.c.l.b16 %v510
    %v646 = vunpack.c.l.b16 %v511
    %v647 = vunpack.c.l.b16 %v512
    %v648 = vunpack.c.l.b16 %v513
    %v649 = vunpack.c.l.b16 %v514
    %v650 = vunpack.c.l.b16 %v515
    %v651 = vunpack.c.l.b16 %v516
    %v652 = vunpack.c.l.b16 %v517
    %v653 = vunpack.c.l.b16 %v518
    %v654 = vunpack.c.l.b16 %v519
    %v655 = vunpack.c.l.b16 %v520
    %v656 = vunpack.c.l.b16 %v521
    %v657 = vunpack.c.l.b16 %v522
    %v658 = vunpack.c.l.b16 %v523
    %v659 = vunpack.c.l.b16 %v524
    %v660 = vunpack.c.l.b16 %v525
    %v661 = vunpack.c.l.b16 %v526
    %v662 = vunpack.c.l.b16 %v527
    %v663 = vunpack.c.l.b16 %v528
    %v664 = vunpack.c.l.b16 %v529
    %v665 = vunpack.c.l.b16 %v530
    %v666 = vunpack.c.l.b16 %v531
    %v667 = vunpack.c.l.b16 %v532
    %v668 = vunpack.c.l.b16 %v533
    %v669 = vunpack.c.l.b16 %v534
    %v670 = vunpack.c.l.b16 %v535
    %v671 = vpack.c.b16 %v608, %v607
    %v672 = vpack.c.b16 %v610, %v609
    %v673 = vpack.c.b16 %v612, %v611
    %v674 = vpack.c.b16 %v614, %v613
    %v675 = vpack.c.b16 %v616, %v615
    %v676 = vpack.c.b16 %v618, %v617
    %v677 = vpack.c.b16 %v620, %v619
    %v678 = vpack.c.b16 %v622, %v621
    %v679 = vpack.c.b16 %v624, %v623
    %v680 = vpack.c.b16 %v626, %v625
    %v681 = vpack.c.b16 %v628, %v627
    %v682 = vpack.c.b16 %v630, %v629
    %v683 = vpack.c.b16 %v632, %v631
    %v684 = vpack.c.b16 %v634, %v633
    %v685 = vpack.c.b16 %v636, %v635
    %v686 = vpack.c.b16 %v638, %v637
    %v687 = vpack.c.b16 %v640, %v639
    %v688 = vpack.c.b16 %v642, %v641
    %v689 = vpack.c.b16 %v644, %v643
    %v690 = vpack.c.b16 %v646, %v645
    %v691 = vpack.c.b16 %v648, %v647
    %v692 = vpack.c.b16 %v650, %v649
    %v693 = vpack.c.b16 %v652, %v651
    %v694 = vpack.c.b16 %v654, %v653
    %v695 = vpack.c.b16 %v656, %v655
    %v696 = vpack.c.b16 %v658, %v657
    %v697 = vpack.c.b16 %v660, %v659
    %v698 = vpack.c.b16 %v662, %v661
    %v699 = vpack.c.b16 %v664, %v663
    %v700 = vpack.c.b16 %v666, %v665
    %v701 = vpack.c.b16 %v668, %v667
    %v702 = vpack.c.b16 %v670, %v669
    %735 = vmatprep.subr.bf16.mxu0 0
    %736 = vmatpush1.bf16.msra.mxu0 %v671
    %737 = vmatprep.subr.bf16.mxu0 0
    %738 = vmatpush1.bf16.msra.mxu0 %v672
    %739 = vmatprep.subr.bf16.mxu0 0
    %740 = vmatpush1.bf16.msra.mxu0 %v673
    %741 = vmatprep.subr.bf16.mxu0 0
    %742 = vmatpush1.bf16.msra.mxu0 %v674
    %743 = vmatprep.subr.bf16.mxu0 0
    %744 = vmatpush1.bf16.msra.mxu0 %v675
    %745 = vmatprep.subr.bf16.mxu0 0
    %746 = vmatpush1.bf16.msra.mxu0 %v676
    %747 = vmatprep.subr.bf16.mxu0 0
    %748 = vmatpush1.bf16.msra.mxu0 %v677
    %749 = vmatprep.subr.bf16.mxu0 0
    %750 = vmatpush1.bf16.msra.mxu0 %v678
    %751 = vmatprep.subr.bf16.mxu0 0
    %752 = vmatpush1.bf16.msra.mxu0 %v679
    %753 = vmatprep.subr.bf16.mxu0 0
    %754 = vmatpush1.bf16.msra.mxu0 %v680
    %755 = vmatprep.subr.bf16.mxu0 0
    %756 = vmatpush1.bf16.msra.mxu0 %v681
    %757 = vmatprep.subr.bf16.mxu0 0
    %758 = vmatpush1.bf16.msra.mxu0 %v682
    %759 = vmatprep.subr.bf16.mxu0 0
    %760 = vmatpush1.bf16.msra.mxu0 %v683
    %761 = vmatprep.subr.bf16.mxu0 0
    %762 = vmatpush1.bf16.msra.mxu0 %v684
    %763 = vmatprep.subr.bf16.mxu0 0
    %764 = vmatpush1.bf16.msra.mxu0 %v685
    %765 = vmatprep.subr.bf16.mxu0 0
    %766 = vmatpush1.bf16.msra.mxu0 %v686
    %767 = vmatprep.mubr.bf16.mxu0 %v469
    %768 = vmatmul.mubr.bf16.gmra.mrb[0].mxu0 %v468
    %v769 = vpop.f32.mrb[0].mxu0
    %v770 = vadd.f32 %v541, %v769
    %v771 = vpop.f32.mrb[0].mxu0
    %v772 = vpop.f32.mrb[0].mxu0
    %v773 = vadd.f32 %v541, %v772
    %v774 = vpop.f32.mrb[0].mxu0
    %775 = vdwg.mxu0
    %776 = vmatprep.subr.bf16.mxu0 0
    %777 = vmatpush1.bf16.msra.mxu0 %v687
    %778 = vmatprep.subr.bf16.mxu0 0
    %779 = vmatpush1.bf16.msra.mxu0 %v688
    %780 = vmatprep.subr.bf16.mxu0 0
    %781 = vmatpush1.bf16.msra.mxu0 %v689
    %782 = vmatprep.subr.bf16.mxu0 0
    %783 = vmatpush1.bf16.msra.mxu0 %v690
    %784 = vmatprep.subr.bf16.mxu0 0
    %785 = vmatpush1.bf16.msra.mxu0 %v691
    %786 = vmatprep.subr.bf16.mxu0 0
    %787 = vmatpush1.bf16.msra.mxu0 %v692
    %788 = vmatprep.subr.bf16.mxu0 0
    %789 = vmatpush1.bf16.msra.mxu0 %v693
    %790 = vmatprep.subr.bf16.mxu0 0
    %791 = vmatpush1.bf16.msra.mxu0 %v694
    %792 = vmatprep.subr.bf16.mxu0 0
    %793 = vmatpush1.bf16.msra.mxu0 %v695
    %794 = vmatprep.subr.bf16.mxu0 0
    %795 = vmatpush1.bf16.msra.mxu0 %v696
    %796 = vmatprep.subr.bf16.mxu0 0
    %797 = vmatpush1.bf16.msra.mxu0 %v697
    %798 = vmatprep.subr.bf16.mxu0 0
    %799 = vmatpush1.bf16.msra.mxu0 %v698
    %800 = vmatprep.subr.bf16.mxu0 0
    %801 = vmatpush1.bf16.msra.mxu0 %v699
    %802 = vmatprep.subr.bf16.mxu0 0
    %803 = vmatpush1.bf16.msra.mxu0 %v700
    %804 = vmatprep.subr.bf16.mxu0 0
    %805 = vmatpush1.bf16.msra.mxu0 %v701
    %806 = vmatprep.subr.bf16.mxu0 0
    %807 = vmatpush1.bf16.msra.mxu0 %v702
    %808 = vmatprep.mubr.bf16.mxu0 %v471
    %809 = vmatmul.mubr.bf16.gmra.mrb[0].mxu0 %v470
    %v810 = vpop.f32.mrb[0].mxu0
    %v811 = vadd.f32 %v770, %v810
    %v812 = vpop.f32.mrb[0].mxu0
    %v813 = vpop.f32.mrb[0].mxu0
    %v814 = vadd.f32 %v773, %v813
    %v815 = vpop.f32.mrb[0].mxu0
    %816 = vdwg.mxu0
    %v817 = vpack.c.bf16 %v814, %v811
    %v819 = vunpack.c.l.b16 %v817
    %v820 = vunpack.c.h.b16 %v817
    %v821 = vpack.c.b16 %v819, %v819
    %v822 = vpack.c.b16 %v820, %v820
    %825 = vst [vmem:[#allocation8] sm:$0xf] %v821
    %826 = vst [vmem:[#allocation8 + $0x4] sm:$0xf] %v822
    // Predicated region
    $region42: #{tpu_custom_call.1} parent=1 // pred_check
      _
    $region43: #{tpu_custom_call.1} parent=1 // pred_check_branch
      %828 = sbr.rel (0) target = $region45
    $region44: #{tpu_custom_call.1} parent=1 // pred_region
      %s830 = ssub.s32 128, 128
      %831 = vsyncadd [#allocation4], %s830
      %s832 = sshll.u32 [#allocation8], 4
      %s833 = int_to_ptr.vmem [resolvable:$true] %s832
      %838 = dma.vmem_to_hbm [thread:$0]  %s833, 128, %s7, [#allocation4], 64, 64, 4
    $region45: #{tpu_custom_call.1} parent=1 // pred_fallthru
      _
    // Predicated region
    $region46: #{tpu_custom_call.1} parent=1 // pred_check
      _
    $region47: #{tpu_custom_call.1} parent=1 // pred_check_branch
      %840 = sbr.rel (0) target = $region49
    $region48: #{tpu_custom_call.1} parent=1 // pred_region
      %841 = dma.done [#allocation4], 128
    $region49: #{tpu_custom_call.1} parent=1 // pred_fallthru
      _
    %842 = vsyncpa [#allocation3], 1
    %843 = vsyncpa [#allocation6], 1
    %844 = vsyncpa [#allocation4], 1

</llo_original>
